<compile_context>
chip_gen: v7x
topology: tpu7x:2x2x1
jax: 0.10.0
libtpu: 0.0.40
codegen_flags: <defaults>
</compile_context>

<pallas_src>
import functools

import jax
import jax.numpy as jnp
from jax.experimental import pallas as pl
from jax.experimental.pallas import tpu as pltpu


# ---------------------------------------------------------------------------
# helpers
# ---------------------------------------------------------------------------
def _round_up(x: int, m: int) -> int:
    return ((x + m - 1) // m) * m


def _vmem_capacity_bytes() -> int:
    try:
        return int(pltpu.get_tpu_info().vmem_capacity_bytes)
    except Exception:
        return 64 * 1024 * 1024  # conservative: v7x per-TensorCore VMEM


def _choose_tile_batch(batch: int, p_pad: int, itemsize: int) -> int:
    # 2 policy inputs x 2 pipeline buffers per tile must fit in ~1/4 of VMEM,
    # leaving headroom for the resident value arrays, output and scratch.
    budget = _vmem_capacity_bytes() // 4
    per_row = 2 * 2 * p_pad * itemsize
    tb = budget // max(per_row, 1)
    tb = max(8, min(int(tb), 2048))
    tb = (tb // 8) * 8
    return min(tb, _round_up(batch, 8))


# ---------------------------------------------------------------------------
# kernel
# ---------------------------------------------------------------------------
def _combined_loss_kernel(batch,                       # static python int (true B)
                          w_ref,                       # SMEM (2,): [policy_w, value_w]
                          plog_ref, ptgt_ref,          # VMEM (TB, P_pad) tiles
                          vout_ref, vtgt_ref,          # VMEM (B, 3) resident
                          out_ref,                     # VMEM (1, 128) packed result
                          pacc_ref, vacc_ref):         # VMEM (1, 1) f32 accumulators
    i = pl.program_id(0)
    last = pl.num_programs(0) - 1

    @pl.when(i == 0)
    def _init():
        out_ref[...] = jnp.zeros_like(out_ref)
        pacc_ref[...] = jnp.zeros_like(pacc_ref)

        # ---- value loss (tiny [B, 3]); compute once on the resident arrays ----
        v = vout_ref[...].astype(jnp.float32)
        vt = vtgt_ref[...].astype(jnp.float32)
        vm = jnp.max(v, axis=-1, keepdims=True)
        vz = v - vm
        vlse = jnp.log(jnp.sum(jnp.exp(vz), axis=-1, keepdims=True))
        vlog_probs = vz - vlse

        b, c = vt.shape
        col = jax.lax.broadcasted_iota(jnp.int32, (b, c), 1)
        t_max = jnp.max(vt, axis=-1, keepdims=True)
        first_idx = jnp.min(jnp.where(vt == t_max, col, jnp.int32(c)),
                            axis=-1, keepdims=True)          # first max (torch argmax)
        onehot = (col == first_idx).astype(jnp.float32)
        vacc_ref[...] = -jnp.sum(onehot * vlog_probs, keepdims=True)

    # ---- policy cross-entropy: accumulate the SUM over this batch tile ----
    logits = plog_ref[...].astype(jnp.float32)
    targets = ptgt_ref[...].astype(jnp.float32)
    m = jnp.max(logits, axis=-1, keepdims=True)
    z = logits - m
    lse = jnp.log(jnp.sum(jnp.exp(z), axis=-1, keepdims=True))
    # fused row-sum + batch-sum (padded cols/rows have zero targets -> contribute 0)
    pacc_ref[...] += -jnp.sum(targets * (z - lse), keepdims=True)

    @pl.when(i == last)
    def _finalize():
        inv_b = jnp.float32(1.0 / batch)
        pw = w_ref[0]
        vw = w_ref[1]
        ploss = pacc_ref[...] * inv_b        # (1, 1)
        vloss = vacc_ref[...] * inv_b        # (1, 1)
        total = pw * ploss + vw * vloss      # (1, 1)
        col = jax.lax.broadcasted_iota(jnp.int32, out_ref.shape, 1)
        out_ref[...] = (jnp.where(col == 0, total, 0.0)
                        + jnp.where(col == 1, ploss, 0.0)
                        + jnp.where(col == 2, vloss, 0.0))


# ---------------------------------------------------------------------------
# wrapper
# ---------------------------------------------------------------------------
def combined_loss(policy_logits, value_output, policy_targets, value_targets,
                  policy_weight=1.0, value_weight=1.0):
    """Returns (total_loss, loss_dict) with CombinedLoss.forward semantics.

    loss_dict values are device scalars (no host sync); the function is jittable.
    """
    B, P = policy_logits.shape
    P_pad = _round_up(P, 128)                               # lane-aligned class dim
    itemsize = jnp.dtype(policy_logits.dtype).itemsize
    TB = _choose_tile_batch(B, P_pad, itemsize)
    B_pad = _round_up(B, TB)

    pad_r, pad_c = B_pad - B, P_pad - P
    plog, ptgt = policy_logits, policy_targets
    if pad_r or pad_c:
        # padded logits are a huge negative (exp -> 0); padded targets are 0, so
        # padded rows/cols contribute exactly 0 to the accumulated CE sum.
        plog = jnp.pad(plog, ((0, pad_r), (0, pad_c)), constant_values=-1e30)
        ptgt = jnp.pad(ptgt, ((0, pad_r), (0, pad_c)), constant_values=0)

    weights = jnp.stack([jnp.asarray(policy_weight, jnp.float32),
                         jnp.asarray(value_weight, jnp.float32)])

    buf_bytes = 2 * 2 * TB * P_pad * itemsize               # 2 inputs x 2 buffers
    vmem_cap = _vmem_capacity_bytes()
    vmem_limit = int(min(vmem_cap * 3 // 4,
                         max(2 * buf_bytes, 32 * 1024 * 1024)))

    grid = (B_pad // TB,)
    kernel = functools.partial(_combined_loss_kernel, B)

    vmem_full = pl.BlockSpec(memory_space=pltpu.MemorySpace.VMEM)
    smem_full = pl.BlockSpec(memory_space=pltpu.MemorySpace.SMEM)

    out = pl.pallas_call(
        kernel,
        out_shape=jax.ShapeDtypeStruct((1, 128), jnp.float32),
        grid_spec=pltpu.PrefetchScalarGridSpec(
            num_scalar_prefetch=0,
            grid=grid,
            in_specs=[
                smem_full,                                   # weights (2,)
                pl.BlockSpec((TB, P_pad), lambda i: (i, 0)),  # policy logits tile
                pl.BlockSpec((TB, P_pad), lambda i: (i, 0)),  # policy targets tile
                vmem_full,                                   # value output  (B, 3)
                vmem_full,                                   # value targets (B, 3)
            ],
            out_specs=vmem_full,
            scratch_shapes=[pltpu.VMEM((1, 1), jnp.float32),  # policy CE sum
                            pltpu.VMEM((1, 1), jnp.float32)],  # value CE sum
        ),
        compiler_params=pltpu.CompilerParams(
            dimension_semantics=("arbitrary",),              # batch axis is a reduction
            vmem_limit_bytes=vmem_limit,
        ),
    )(weights, plog, ptgt, value_output, value_targets)

    total_loss = out[0, 0]
    loss_dict = {
        "total_loss": out[0, 0],
        "policy_loss": out[0, 1],
        "value_loss": out[0, 2],
    }
    return total_loss, loss_dict


# ---------------------------------------------------------------------------
# reference + demo
# ---------------------------------------------------------------------------
def _reference(policy_logits, value_output, policy_targets, value_targets,
               policy_weight=1.0, value_weight=1.0):
    lp = jax.nn.log_softmax(policy_logits.astype(jnp.float32), axis=-1)
    p_loss = jnp.mean(-jnp.sum(policy_targets.astype(jnp.float32) * lp, axis=-1))
    hard = jnp.argmax(value_targets, axis=-1)
    vlp = jax.nn.log_softmax(value_output.astype(jnp.float32), axis=-1)
    v_loss = jnp.mean(-jnp.take_along_axis(vlp, hard[:, None], axis=-1)[:, 0])
    return value_weight * v_loss + policy_weight * p_loss, p_loss, v_loss


if __name__ == "__main__":
    key = jax.random.PRNGKey(0)
    k1, k2, k3, k4 = jax.random.split(key, 4)

    batch, policy_size, wdl = 8, 128, 3

    policy_logits = jax.random.normal(k1, (batch, policy_size), dtype=jnp.float32)
    value_output = jax.random.normal(k2, (batch, wdl), dtype=jnp.float32)
    # MCTS visit distribution (soft targets) and WDL target distribution
    policy_targets = jax.nn.softmax(jax.random.normal(k3, (batch, policy_size)), axis=-1)
    value_targets = jax.nn.softmax(jax.random.normal(k4, (batch, wdl)), axis=-1)

    loss_fn = jax.jit(combined_loss)

    total_loss, loss_dict = loss_fn(policy_logits, value_output,
                                    policy_targets, value_targets, 1.0, 1.0)
    total_loss = jax.block_until_ready(total_loss)

    ref_t, ref_p, ref_v = _reference(policy_logits, value_output,
                                     policy_targets, value_targets, 1.0, 1.0)
    assert jnp.allclose(total_loss, ref_t, rtol=1e-5, atol=1e-5), (total_loss, ref_t)
    assert jnp.allclose(loss_dict["policy_loss"], ref_p, rtol=1e-5, atol=1e-5)
    assert jnp.allclose(loss_dict["value_loss"], ref_v, rtol=1e-5, atol=1e-5)

    # Exercise the padding path (ragged batch, non-128-aligned policy head) and
    # non-default weights flowing through SMEM (no recompile per weight value).
    b2, p2 = 6, 200
    pl2 = jax.random.normal(k1, (b2, p2), dtype=jnp.float32)
    vo2 = jax.random.normal(k2, (b2, wdl), dtype=jnp.float32)
    pt2 = jax.nn.softmax(jax.random.normal(k3, (b2, p2)), axis=-1)
    vt2 = jax.nn.softmax(jax.random.normal(k4, (b2, wdl)), axis=-1)
    t2, d2 = loss_fn(pl2, vo2, pt2, vt2, 0.7, 1.3)
    t2 = jax.block_until_ready(t2)
    r2, rp2, rv2 = _reference(pl2, vo2, pt2, vt2, 0.7, 1.3)
    assert jnp.allclose(t2, r2, rtol=1e-5, atol=1e-5), (t2, r2)
    assert jnp.allclose(d2["policy_loss"], rp2, rtol=1e-5, atol=1e-5)
    assert jnp.allclose(d2["value_loss"], rv2, rtol=1e-5, atol=1e-5)

    print("KERNEL_OK")
</pallas_src>

<mosaic_0001>
module attributes {stable_mosaic.version = 11 : i64} {
  func.func @_combined_loss_kernel(%arg0: i32, %arg1: memref<2xf32, #tpu.memory_space<smem>>, %arg2: memref<8x128xf32, #tpu.memory_space<vmem>>, %arg3: memref<8x128xf32, #tpu.memory_space<vmem>>, %arg4: memref<8x3xf32, #tpu.memory_space<vmem>>, %arg5: memref<8x3xf32, #tpu.memory_space<vmem>>, %arg6: memref<1x128xf32, #tpu.memory_space<vmem>>, %arg7: memref<1x1xf32, #tpu.memory_space<vmem>>, %arg8: memref<1x1xf32, #tpu.memory_space<vmem>>) attributes {dimension_semantics = [#tpu.dimension_semantics<arbitrary>], iteration_bounds = array<i64: 1>, scalar_prefetch = 0 : i64, scratch_operands = 2 : i64, tpu.core_type = #tpu.core_type<tc>, window_params = [{transform_indices = @transform_0, window_bounds = array<i64: 2>}, {transform_indices = @transform_1, window_bounds = array<i64: 8, 128>}, {transform_indices = @transform_2, window_bounds = array<i64: 8, 128>}, {pipeline_mode = #tpu.pipeline_mode<synchronous>, transform_indices = @transform_3, window_bounds = array<i64: 8, 3>}, {pipeline_mode = #tpu.pipeline_mode<synchronous>, transform_indices = @transform_4, window_bounds = array<i64: 8, 3>}, {pipeline_mode = #tpu.pipeline_mode<synchronous>, transform_indices = @transform_5, window_bounds = array<i64: 1, 128>}]} {
    %c0_i32 = arith.constant 0 : i32
    %0 = arith.cmpi eq, %arg0, %c0_i32 : i32
    %1 = arith.extui %0 : i1 to i32
    %c0_i32_0 = arith.constant 0 : i32
    %2 = arith.cmpi ne, %1, %c0_i32_0 : i32
    scf.if %2 {
      %cst_13 = arith.constant 0.000000e+00 : f32
      %29 = vector.broadcast %cst_13 : f32 to vector<1x128xf32>
      %c0_14 = arith.constant 0 : index
      %c0_15 = arith.constant 0 : index
      %30 = vector.load %arg6[%c0_14, %c0_15] : memref<1x128xf32, #tpu.memory_space<vmem>>, vector<1x128xf32>
      tpu.vector_store %arg6[%c0_14, %c0_15], %29 {strides = array<i32>} : memref<1x128xf32, #tpu.memory_space<vmem>>, vector<1x128xf32>,
      %cst_16 = arith.constant 0.000000e+00 : f32
      %31 = vector.broadcast %cst_16 : f32 to vector<1x1xf32>
      %c0_17 = arith.constant 0 : index
      %c0_18 = arith.constant 0 : index
      %32 = vector.load %arg7[%c0_17, %c0_18] : memref<1x1xf32, #tpu.memory_space<vmem>>, vector<1x1xf32>
      tpu.vector_store %arg7[%c0_17, %c0_18], %31 {strides = array<i32>} : memref<1x1xf32, #tpu.memory_space<vmem>>, vector<1x1xf32>,
      %c0_19 = arith.constant 0 : index
      %c0_20 = arith.constant 0 : index
      %33 = vector.load %arg4[%c0_19, %c0_20] : memref<8x3xf32, #tpu.memory_space<vmem>>, vector<8x3xf32>
      %c0_21 = arith.constant 0 : index
      %c0_22 = arith.constant 0 : index
      %34 = vector.load %arg5[%c0_21, %c0_22] : memref<8x3xf32, #tpu.memory_space<vmem>>, vector<8x3xf32>
      %cst_23 = arith.constant dense<0xFF800000> : vector<8xf32>
      %35 = vector.multi_reduction <maximumf>, %33, %cst_23 [1] : vector<8x3xf32> to vector<8xf32>
      %36 = vector.shape_cast %35 : vector<8xf32> to vector<8x1xf32>
      %37 = vector.broadcast %36 : vector<8x1xf32> to vector<8x3xf32>
      %38 = arith.subf %33, %37 : vector<8x3xf32>
      %39 = math.exp %38 : vector<8x3xf32>
      %cst_24 = arith.constant dense<0.000000e+00> : vector<8xf32>
      %40 = vector.multi_reduction <add>, %39, %cst_24 [1] : vector<8x3xf32> to vector<8xf32>
      %41 = vector.shape_cast %40 : vector<8xf32> to vector<8x1xf32>
      %42 = math.log %41 : vector<8x1xf32>
      %43 = vector.broadcast %42 : vector<8x1xf32> to vector<8x3xf32>
      %44 = arith.subf %38, %43 : vector<8x3xf32>
      %45 = tpu.iota {dimensions = array<i32: 1>} : vector<8x3xi32>
      %cst_25 = arith.constant dense<0xFF800000> : vector<8xf32>
      %46 = vector.multi_reduction <maximumf>, %34, %cst_25 [1] : vector<8x3xf32> to vector<8xf32>
      %47 = vector.shape_cast %46 : vector<8xf32> to vector<8x1xf32>
      %48 = vector.broadcast %47 : vector<8x1xf32> to vector<8x3xf32>
      %49 = arith.cmpf oeq, %34, %48 : vector<8x3xf32>
      %c3_i32 = arith.constant 3 : i32
      %50 = vector.broadcast %c3_i32 : i32 to vector<8x3xi32>
      %51 = arith.select %49, %45, %50 : vector<8x3xi1>, vector<8x3xi32>
      %cst_26 = arith.constant dense<2147483647> : vector<8xi32>
      %52 = vector.multi_reduction <minsi>, %51, %cst_26 [1] : vector<8x3xi32> to vector<8xi32>
      %53 = vector.shape_cast %52 : vector<8xi32> to vector<8x1xi32>
      %54 = vector.broadcast %53 : vector<8x1xi32> to vector<8x3xi32>
      %55 = arith.cmpi eq, %45, %54 : vector<8x3xi32>
      %56 = arith.extui %55 : vector<8x3xi1> to vector<8x3xi32>
      %57 = arith.sitofp %56 : vector<8x3xi32> to vector<8x3xf32>
      %58 = arith.mulf %57, %44 : vector<8x3xf32>
      %59 = vector.shape_cast %58 : vector<8x3xf32> to vector<1x8x3xf32>
      %cst_27 = arith.constant dense<0.000000e+00> : vector<1xf32>
      %60 = vector.multi_reduction <add>, %59, %cst_27 [1, 2] : vector<1x8x3xf32> to vector<1xf32>
      %61 = vector.shape_cast %60 : vector<1xf32> to vector<1x1x1xf32>
      %62 = vector.extract %61[0, 0, 0] : f32 from vector<1x1x1xf32>
      %63 = vector.broadcast %62 : f32 to vector<1x1xf32>
      %cst_28 = arith.constant 0.000000e+00 : f32
      %64 = vector.broadcast %cst_28 : f32 to vector<1x1xf32>
      %65 = arith.subf %64, %63 : vector<1x1xf32>
      %c0_29 = arith.constant 0 : index
      %c0_30 = arith.constant 0 : index
      %66 = vector.load %arg8[%c0_29, %c0_30] : memref<1x1xf32, #tpu.memory_space<vmem>>, vector<1x1xf32>
      tpu.vector_store %arg8[%c0_29, %c0_30], %65 {strides = array<i32>} : memref<1x1xf32, #tpu.memory_space<vmem>>, vector<1x1xf32>,
    } else {
    }
    %c0 = arith.constant 0 : index
    %c0_1 = arith.constant 0 : index
    %3 = vector.load %arg2[%c0, %c0_1] : memref<8x128xf32, #tpu.memory_space<vmem>>, vector<8x128xf32>
    %c0_2 = arith.constant 0 : index
    %c0_3 = arith.constant 0 : index
    %4 = vector.load %arg3[%c0_2, %c0_3] : memref<8x128xf32, #tpu.memory_space<vmem>>, vector<8x128xf32>
    %cst = arith.constant dense<0xFF800000> : vector<8xf32>
    %5 = vector.multi_reduction <maximumf>, %3, %cst [1] : vector<8x128xf32> to vector<8xf32>
    %6 = vector.shape_cast %5 : vector<8xf32> to vector<8x1xf32>
    %7 = vector.broadcast %6 : vector<8x1xf32> to vector<8x128xf32>
    %8 = arith.subf %3, %7 : vector<8x128xf32>
    %9 = math.exp %8 : vector<8x128xf32>
    %cst_4 = arith.constant dense<0.000000e+00> : vector<8xf32>
    %10 = vector.multi_reduction <add>, %9, %cst_4 [1] : vector<8x128xf32> to vector<8xf32>
    %11 = vector.shape_cast %10 : vector<8xf32> to vector<8x1xf32>
    %12 = math.log %11 : vector<8x1xf32>
    %c0_5 = arith.constant 0 : index
    %c0_6 = arith.constant 0 : index
    %13 = vector.load %arg7[%c0_5, %c0_6] : memref<1x1xf32, #tpu.memory_space<vmem>>, vector<1x1xf32>
    %14 = vector.broadcast %12 : vector<8x1xf32> to vector<8x128xf32>
    %15 = arith.subf %8, %14 : vector<8x128xf32>
    %16 = arith.mulf %4, %15 : vector<8x128xf32>
    %17 = vector.shape_cast %16 : vector<8x128xf32> to vector<1x8x128xf32>
    %cst_7 = arith.constant dense<0.000000e+00> : vector<1xf32>
    %18 = vector.multi_reduction <add>, %17, %cst_7 [1, 2] : vector<1x8x128xf32> to vector<1xf32>
    %19 = vector.shape_cast %18 : vector<1xf32> to vector<1x1x1xf32>
    %20 = vector.extract %19[0, 0, 0] : f32 from vector<1x1x1xf32>
    %21 = vector.broadcast %20 : f32 to vector<1x1xf32>
    %cst_8 = arith.constant 0.000000e+00 : f32
    %22 = vector.broadcast %cst_8 : f32 to vector<1x1xf32>
    %23 = arith.subf %22, %21 : vector<1x1xf32>
    %24 = arith.addf %13, %23 : vector<1x1xf32>
    %c0_9 = arith.constant 0 : index
    %c0_10 = arith.constant 0 : index
    %25 = vector.load %arg7[%c0_9, %c0_10] : memref<1x1xf32, #tpu.memory_space<vmem>>, vector<1x1xf32>
    tpu.vector_store %arg7[%c0_9, %c0_10], %24 {strides = array<i32>} : memref<1x1xf32, #tpu.memory_space<vmem>>, vector<1x1xf32>,
    %c0_i32_11 = arith.constant 0 : i32
    %26 = arith.cmpi eq, %arg0, %c0_i32_11 : i32
    %27 = arith.extui %26 : i1 to i32
    %c0_i32_12 = arith.constant 0 : i32
    %28 = arith.cmpi ne, %27, %c0_i32_12 : i32
    scf.if %28 {
      %c0_13 = arith.constant 0 : index
      %29 = memref.load %arg1[%c0_13] : memref<2xf32, #tpu.memory_space<smem>>
      %c1 = arith.constant 1 : index
      %30 = memref.load %arg1[%c1] : memref<2xf32, #tpu.memory_space<smem>>
      %c0_14 = arith.constant 0 : index
      %c0_15 = arith.constant 0 : index
      %31 = vector.load %arg7[%c0_14, %c0_15] : memref<1x1xf32, #tpu.memory_space<vmem>>, vector<1x1xf32>
      %cst_16 = arith.constant 1.250000e-01 : f32
      %32 = vector.broadcast %cst_16 : f32 to vector<1x1xf32>
      %33 = arith.mulf %31, %32 : vector<1x1xf32>
      %c0_17 = arith.constant 0 : index
      %c0_18 = arith.constant 0 : index
      %34 = vector.load %arg8[%c0_17, %c0_18] : memref<1x1xf32, #tpu.memory_space<vmem>>, vector<1x1xf32>
      %cst_19 = arith.constant 1.250000e-01 : f32
      %35 = vector.broadcast %cst_19 : f32 to vector<1x1xf32>
      %36 = arith.mulf %34, %35 : vector<1x1xf32>
      %37 = vector.broadcast %29 : f32 to vector<1x1xf32>
      %38 = arith.mulf %37, %33 : vector<1x1xf32>
      %39 = vector.broadcast %30 : f32 to vector<1x1xf32>
      %40 = arith.mulf %39, %36 : vector<1x1xf32>
      %41 = arith.addf %38, %40 : vector<1x1xf32>
      %42 = tpu.iota {dimensions = array<i32: 1>} : vector<1x128xi32>
      %c0_i32_20 = arith.constant 0 : i32
      %43 = vector.broadcast %c0_i32_20 : i32 to vector<1x128xi32>
      %44 = arith.cmpi eq, %42, %43 : vector<1x128xi32>
      %cst_21 = arith.constant 0.000000e+00 : f32
      %45 = vector.shape_cast %41 : vector<1x1xf32> to vector<1x1xf32>
      %46 = vector.broadcast %45 : vector<1x1xf32> to vector<1x128xf32>
      %47 = vector.broadcast %cst_21 : f32 to vector<1x128xf32>
      %48 = arith.select %44, %46, %47 : vector<1x128xi1>, vector<1x128xf32>
      %c1_i32 = arith.constant 1 : i32
      %49 = vector.broadcast %c1_i32 : i32 to vector<1x128xi32>
      %50 = arith.cmpi eq, %42, %49 : vector<1x128xi32>
      %cst_22 = arith.constant 0.000000e+00 : f32
      %51 = vector.shape_cast %33 : vector<1x1xf32> to vector<1x1xf32>
      %52 = vector.broadcast %51 : vector<1x1xf32> to vector<1x128xf32>
      %53 = vector.broadcast %cst_22 : f32 to vector<1x128xf32>
      %54 = arith.select %50, %52, %53 : vector<1x128xi1>, vector<1x128xf32>
      %55 = arith.addf %48, %54 : vector<1x128xf32>
      %c2_i32 = arith.constant 2 : i32
      %56 = vector.broadcast %c2_i32 : i32 to vector<1x128xi32>
      %57 = arith.cmpi eq, %42, %56 : vector<1x128xi32>
      %cst_23 = arith.constant 0.000000e+00 : f32
      %58 = vector.shape_cast %36 : vector<1x1xf32> to vector<1x1xf32>
      %59 = vector.broadcast %58 : vector<1x1xf32> to vector<1x128xf32>
      %60 = vector.broadcast %cst_23 : f32 to vector<1x128xf32>
      %61 = arith.select %57, %59, %60 : vector<1x128xi1>, vector<1x128xf32>
      %62 = arith.addf %55, %61 : vector<1x128xf32>
      %c0_24 = arith.constant 0 : index
      %c0_25 = arith.constant 0 : index
      %63 = vector.load %arg6[%c0_24, %c0_25] : memref<1x128xf32, #tpu.memory_space<vmem>>, vector<1x128xf32>
      tpu.vector_store %arg6[%c0_24, %c0_25], %62 {strides = array<i32>} : memref<1x128xf32, #tpu.memory_space<vmem>>, vector<1x128xf32>,
    } else {
    }
    return
  }
  func.func @transform_0(%arg0: i32) -> i32 {
    %c0_i32 = arith.constant 0 : i32
    %c0_i32_0 = arith.constant 0 : i32
    return %c0_i32 : i32
  }
  func.func @transform_1(%arg0: i32) -> (i32, i32) {
    %c0_i32 = arith.constant 0 : i32
    %c0_i32_0 = arith.constant 0 : i32
    return %arg0, %c0_i32 : i32, i32
  }
  func.func @transform_2(%arg0: i32) -> (i32, i32) {
    %c0_i32 = arith.constant 0 : i32
    %c0_i32_0 = arith.constant 0 : i32
    return %arg0, %c0_i32 : i32, i32
  }
  func.func @transform_3(%arg0: i32) -> (i32, i32) {
    %c0_i32 = arith.constant 0 : i32
    %c0_i32_0 = arith.constant 0 : i32
    %c0_i32_1 = arith.constant 0 : i32
    return %c0_i32, %c0_i32_0 : i32, i32
  }
  func.func @transform_4(%arg0: i32) -> (i32, i32) {
    %c0_i32 = arith.constant 0 : i32
    %c0_i32_0 = arith.constant 0 : i32
    %c0_i32_1 = arith.constant 0 : i32
    return %c0_i32, %c0_i32_0 : i32, i32
  }
  func.func @transform_5(%arg0: i32) -> (i32, i32) {
    %c0_i32 = arith.constant 0 : i32
    %c0_i32_0 = arith.constant 0 : i32
    %c0_i32_1 = arith.constant 0 : i32
    return %c0_i32, %c0_i32_0 : i32, i32
  }
}

</mosaic_0001>

<llo_original>
// kernel: combined_loss.1
$region0: #{combined_loss.1}
  #allocation0 [shape = 'u32[]', space=smem, size = 0x4, offset = 0x4, fixed_abs, tag = 'smem constant byte address 0x4 - core index']
  #allocation1 [shape = 'u32[144,128]{1,0:T(1,128)}', space=vmem, size = 0x12000, scoped, tag = 'internal scratch']
  #allocation2 [shape = 'f32[1,1]{1,0:T(1,128)}', space=vmem, size = 0x200, scoped, tag = 'scratch operand']
  #allocation3 [shape = 'f32[1,1]{1,0:T(1,128)}', space=vmem, size = 0x200, scoped, tag = 'scratch operand']
  %s0 = inlined_call_operand.vmem [shape: f32[2], index: 0, kind: input, shape index: {}]
  %s1 = inlined_call_operand.vmem [shape: f32[8,128], index: 1, kind: input, shape index: {}]
  %s2 = inlined_call_operand.vmem [shape: f32[8,128], index: 2, kind: input, shape index: {}]
  %s3 = inlined_call_operand.vmem [shape: f32[8,3], index: 3, kind: input, shape index: {}]
  %s4 = inlined_call_operand.vmem [shape: f32[8,3], index: 4, kind: input, shape index: {}]
  %s5 = inlined_call_operand.vmem [shape: f32[1,128], index: 5, kind: output, shape index: {}]
  %s6 = sld [smem:[#allocation0]]
  $region42: #{combined_loss.1} parent=0
    _
  %s8 = ssub.s32 1, %s6
  %s9 = scalar_select 0, %s8, %s6
  $region1: #{combined_loss.1} parent=0
    #allocation4 [shape = 'u8[512]{0}', space=smem, size = 0x200, scoped, tag = 'input window, operand 0, single buffered']
    #allocation5 [shape = 's32[1]{0}', space=sflag, size = 0x4, scoped, tag = 'scoped memory for combined_loss.1']
    %10 = vsyncpa [#allocation5], 0
    // Predicated region
    $region2: #{combined_loss.1} parent=1 // pred_check
      _
    $region3: #{combined_loss.1} parent=1 // pred_check_branch
      %12 = sbr.rel (0) target = $region5
    $region4: #{combined_loss.1} parent=1 // pred_region
      %s14 = ssub.s32 16, 16
      %15 = vsyncadd [#allocation5], %s14
      %s17 = sshll.u32 %s0, 4
      %s18 = int_to_ptr.vmem [resolvable:$true] %s17
      %20 = dma.vmem_to_smem %s18, 16, [#allocation4], [#allocation5]
    $region5: #{combined_loss.1} parent=1 // pred_fallthru
      _
    // Predicated region
    $region6: #{combined_loss.1} parent=1 // pred_check
      _
    $region7: #{combined_loss.1} parent=1 // pred_check_branch
      %22 = sbr.rel (0) target = $region9
    $region8: #{combined_loss.1} parent=1 // pred_region
      _
    $region9: #{combined_loss.1} parent=1 // pred_fallthru
      _
    // Predicated region
    $region10: #{combined_loss.1} parent=1 // pred_check
      _
    $region11: #{combined_loss.1} parent=1 // pred_check_branch
      %24 = sbr.rel (0) target = $region13
    $region12: #{combined_loss.1} parent=1 // pred_region
      _
    $region13: #{combined_loss.1} parent=1 // pred_fallthru
      _
    // Predicated region
    $region14: #{combined_loss.1} parent=1 // pred_check
      _
    $region15: #{combined_loss.1} parent=1 // pred_check_branch
      %26 = sbr.rel (0) target = $region17
    $region16: #{combined_loss.1} parent=1 // pred_region
      _
    $region17: #{combined_loss.1} parent=1 // pred_fallthru
      _
    // Predicated region
    $region18: #{combined_loss.1} parent=1 // pred_check
      _
    $region19: #{combined_loss.1} parent=1 // pred_check_branch
      %28 = sbr.rel (0) target = $region21
    $region20: #{combined_loss.1} parent=1 // pred_region
      _
    $region21: #{combined_loss.1} parent=1 // pred_fallthru
      _
    // Predicated region
    $region22: #{combined_loss.1} parent=1 // pred_check
      _
    $region23: #{combined_loss.1} parent=1 // pred_check_branch
      %30 = sbr.rel (0) target = $region25
    $region24: #{combined_loss.1} parent=1 // pred_region
      %31 = dma.done [#allocation5], 16
    $region25: #{combined_loss.1} parent=1 // pred_fallthru
      _
    %32 = sfence
    %p33 = scmp.eq.s32.totalorder 0, 0
    // Predicated region
    $region26: #{combined_loss.1} parent=1 // pred_check
      %p34 = pneg %p33
    $region27: #{combined_loss.1} parent=1 // pred_check_branch
      %36 = sbr.rel (%p34) target = $region29
    $region28: #{combined_loss.1} parent=1 // pred_region
      %37 = vst [vmem:[%s5] sm:$0x1] 0.0
      %vm38 = vcmask 0
      %39 = vst.msk [vmem:[#allocation2] sm:$0x1] %vm38, 0.0
      %v40 = vld [vmem:[%s3] sm:$0xff]
      %v41 = vld [vmem:[%s4] sm:$0xff]
      %vm42 = vcmask 23552
      %v43 = vsel %vm42, %v40, -inf
      %44 = vmax.xlane.f32.xlu0 %v43
      %v45 = vpop.xlane.xlu0 %44
      %v46 = vsub.f32 %v40, %v45
      %v47 = vmul.f32 %v46, 1.442695
      %v48 = vpow.pop %v47
      %v49 = vsel %vm42, %v48, 0.0
      %50 = vadd.xlane.f32.xlu0 %v49
      %v51 = vpop.xlane.xlu0 %50
      %v52 = vlog2.pop %v51
      %v53 = vmul.f32 %v52, 0.6931472
      %v54 = vsub.f32 %v46, %v53
      %v55 = vlaneseq
      %v56 = vand.u32 %v55, 127
      %v57 = vsel %vm42, %v41, -inf
      %58 = vmax.xlane.f32.xlu0 %v57
      %v59 = vpop.xlane.xlu0 %58
      %vm60 = vcmp.eq.f32.partialorder %v41, %v59
      %v61 = vsel %vm60, %v56, 3
      %v62 = vsel %vm42, %v61, 2147483647
      %v63 = vand.u32 %v62, 65535
      %v64 = vshra.s32 %v62, 16
      %v65 = vcvt.s32.f32 %v63
      %v66 = vcvt.s32.f32 %v64
      %67 = vmin.xlane.f32.xlu0 %v66
      %v68 = vpop.xlane.xlu0 %67
      %vm69 = vcmp.eq.f32.partialorder %v66, %v68
      %v70 = vsel %vm69, %v65, inf
      %71 = vmin.xlane.f32.xlu0 %v70
      %v72 = vpop.xlane.xlu0 %71
      %v73 = vcvt.f32.s32 %v72
      %v74 = vcvt.f32.s32 %v68
      %v75 = vshll.u32 %v74, 16
      %v76 = vadd.s32 %v75, %v73
      %vm77 = vcmp.eq.s32.totalorder %v56, %v76
      %v78 = vsel %vm77, 1, 0
      %v79 = vcvt.s32.f32 %v78
      %v80 = vmul.f32 %v79, %v54
      %v81 = vsel %vm42, %v80, 0.0
      %82 = vadd.xlane.f32.xlu0 %v81
      %v83 = vpop.xlane.xlu0 %82
      %v84 = vrot.slane %v83, 4
      %v85 = vadd.f32 %v83, %v84
      %v86 = vrot.slane %v85, 2
      %v87 = vadd.f32 %v85, %v86
      %v88 = vrot.slane %v87, 1
      %v89 = vadd.f32 %v87, %v88
      %s90 = vtos %v89
      %v91 = vstv %s90
      %v92 = vsub.f32 0.0, %v91
      %93 = vst.msk [vmem:[#allocation3] sm:$0x1] %vm38, %v92
    $region29: #{combined_loss.1} parent=1 // pred_fallthru
      _
    %v94 = vld [vmem:[%s1] sm:$0xff]
    %v95 = vld [vmem:[%s2] sm:$0xff]
    %96 = vmax.xlane.f32.xlu0 %v94
    %v97 = vpop.xlane.xlu0 %96
    %v98 = vsub.f32 %v94, %v97
    %v99 = vmul.f32 %v98, 1.442695
    %v100 = vpow.pop %v99
    %101 = vadd.xlane.f32.xlu0 %v100
    %v102 = vpop.xlane.xlu0 %101
    %v103 = vlog2.pop %v102
    %v104 = vmul.f32 %v103, 0.6931472
    %v105 = vld [vmem:[#allocation2] sm:$0x1]
    %v106 = vsub.f32 %v98, %v104
    %v107 = vmul.f32 %v95, %v106
    %108 = vadd.xlane.f32.xlu0 %v107
    %v109 = vpop.xlane.xlu0 %108
    %v110 = vrot.slane %v109, 4
    %v111 = vadd.f32 %v109, %v110
    %v112 = vrot.slane %v111, 2
    %v113 = vadd.f32 %v111, %v112
    %v114 = vrot.slane %v113, 1
    %v115 = vadd.f32 %v113, %v114
    %s116 = vtos %v115
    %v117 = vstv %s116
    %v118 = vsub.f32 0.0, %v117
    %v119 = vadd.f32 %v105, %v118
    %vm120 = vcmask 0
    %121 = vst.msk [vmem:[#allocation2] sm:$0x1] %vm120, %v119
    // Predicated region
    $region30: #{combined_loss.1} parent=1 // pred_check
      %p122 = pneg %p33
    $region31: #{combined_loss.1} parent=1 // pred_check_branch
      %124 = sbr.rel (%p122) target = $region33
    $region32: #{combined_loss.1} parent=1 // pred_region
      %s125 = sld [smem:[#allocation4]]
      %s126 = sld [smem:[#allocation4 + $0x1]]
      %v127 = vld [vmem:[#allocation2] sm:$0x1]
      %v128 = vmul.f32 %v127, 0.125
      %v129 = vld [vmem:[#allocation3] sm:$0x1]
      %v130 = vmul.f32 %v129, 0.125
      %v131 = vstv %s125
      %v132 = vmul.f32 %v131, %v128
      %v133 = vstv %s126
      %v134 = vmul.f32 %v133, %v130
      %v135 = vadd.f32 %v132, %v134
      %v136 = vlaneseq
      %v137 = vand.u32 %v136, 127
      %vm138 = vcmp.eq.s32.totalorder %v137, 0
      %140 = vset.pattern.permute.xlu0 0
      %141 = vperm.xlu0 %140, %v135
      %v142 = vpop.permute.xlu0 %141
      %v144 = vlaneseq
      %v145 = vshrl.u32 %v144, 7
      %v146 = vsub.s32 0, %v145
      %v147 = vrot.slane %v142, %v146
      %v148 = vsel %vm138, %v147, 0.0
      %vm149 = vcmp.eq.s32.totalorder %v137, 1
      %151 = vset.pattern.permute.xlu0 0
      %152 = vperm.xlu0 %151, %v128
      %v153 = vpop.permute.xlu0 %152
      %v155 = vlaneseq
      %v156 = vshrl.u32 %v155, 7
      %v157 = vsub.s32 0, %v156
      %v158 = vrot.slane %v153, %v157
      %v159 = vsel %vm149, %v158, 0.0
      %v160 = vadd.f32 %v148, %v159
      %vm161 = vcmp.eq.s32.totalorder %v137, 2
      %163 = vset.pattern.permute.xlu0 0
      %164 = vperm.xlu0 %163, %v130
      %v165 = vpop.permute.xlu0 %164
      %v167 = vlaneseq
      %v168 = vshrl.u32 %v167, 7
      %v169 = vsub.s32 0, %v168
      %v170 = vrot.slane %v165, %v169
      %v171 = vsel %vm161, %v170, 0.0
      %v172 = vadd.f32 %v160, %v171
      %173 = vst [vmem:[%s5] sm:$0x1] %v172
    $region33: #{combined_loss.1} parent=1 // pred_fallthru
      _
    // Predicated region
    $region34: #{combined_loss.1} parent=1 // pred_check
      _
    $region35: #{combined_loss.1} parent=1 // pred_check_branch
      %175 = sbr.rel (0) target = $region37
    $region36: #{combined_loss.1} parent=1 // pred_region
      _
    $region37: #{combined_loss.1} parent=1 // pred_fallthru
      _
    // Predicated region
    $region38: #{combined_loss.1} parent=1 // pred_check
      _
    $region39: #{combined_loss.1} parent=1 // pred_check_branch
      %177 = sbr.rel (0) target = $region41
    $region40: #{combined_loss.1} parent=1 // pred_region
      _
    $region41: #{combined_loss.1} parent=1 // pred_fallthru
      _
    %178 = vsyncpa [#allocation5], 1

</llo_original>
